<compile_context>
chip_gen: v5e
topology: v5e:2x2
jax: 0.10.0
libtpu: 0.0.40
codegen_flags: <defaults>
</compile_context>

<pallas_src>
import functools

import jax
import jax.numpy as jnp
from jax.experimental import pallas as pl
from jax.experimental.pallas import tpu as pltpu

_SUBLANE = 8    # f32 sublane quantum
_LANE = 128     # lane quantum


def _round_up(n, m):
    return (n + m - 1) // m * m


def _fused_mlp_kernel(*refs, num_layers):
    """refs = (x, w0, b0, w1, b1, ..., w_{L-1}, b_{L-1}, out).

    x:  [Bp, F0p]        (padded, lane-dense)
    wl: [F_{l}p, F_{l+1}p]
    bl: [1, F_{l+1}p]
    out:[Bp, F_Lp]
    """
    x_ref = refs[0]
    o_ref = refs[-1]

    h = x_ref[...].astype(jnp.float32)
    for layer in range(num_layers):
        w_ref = refs[1 + 2 * layer]
        b_ref = refs[2 + 2 * layer]
        y = jnp.dot(h, w_ref[...], preferred_element_type=jnp.float32)
        y = y + b_ref[...]                      # bias, broadcast [1, Fout]
        if layer < num_layers - 1:
            y = jnp.maximum(y, 0.0)             # ReLU on hidden layers only
        h = y
    o_ref[...] = h.astype(o_ref.dtype)


def class_predictor_forward(x, params):
    """Inference-mode ClassPredictor forward as one fused Pallas kernel.

    `params` is a list of (w, b) with w stored as [F_in, F_out] (transposed
    vs. torch.nn.Linear) and b as [F_out].
    """
    B = x.shape[0]
    xf = x.reshape(B, -1)                       # torch.flatten(x, start_dim=1)
    fin0 = xf.shape[1]
    fout_last = params[-1][0].shape[1]
    num_layers = len(params)
    dtype = xf.dtype

    bp = _round_up(B, _SUBLANE)
    fin0_p = _round_up(fin0, _LANE)
    fout_last_p = _round_up(fout_last, _LANE)

    # Pad input to [Bp, Fin_p] (sublane/lane aligned).
    x_pad = jnp.zeros((bp, fin0_p), dtype).at[:B, :fin0].set(xf)

    flat_args = [x_pad]
    flops = 0
    bytes_accessed = x_pad.size * x_pad.dtype.itemsize
    for (w, b) in params:
        fin, fout = w.shape
        fin_p, fout_p = _round_up(fin, _LANE), _round_up(fout, _LANE)
        w_pad = jnp.zeros((fin_p, fout_p), dtype).at[:fin, :fout].set(w)
        b_pad = jnp.zeros((1, fout_p), dtype).at[0, :fout].set(b)
        flat_args += [w_pad, b_pad]
        flops += 2 * bp * fin_p * fout_p
        bytes_accessed += (w_pad.size * w_pad.dtype.itemsize
                           + b_pad.size * b_pad.dtype.itemsize)
    bytes_accessed += bp * fout_last_p * jnp.dtype(dtype).itemsize

    out_pad = pl.pallas_call(
        functools.partial(_fused_mlp_kernel, num_layers=num_layers),
        out_shape=jax.ShapeDtypeStruct((bp, fout_last_p), dtype),
        # Whole arrays as single VMEM-resident blocks (shapes are tiny).
        in_specs=[pl.BlockSpec(memory_space=pltpu.MemorySpace.VMEM)
                  for _ in flat_args],
        out_specs=pl.BlockSpec(memory_space=pltpu.MemorySpace.VMEM),
        cost_estimate=pl.CostEstimate(
            flops=flops, transcendentals=0, bytes_accessed=bytes_accessed),
    )(*flat_args)

    # Strip the padding back off.
    return out_pad[:B, :fout_last]


def init_class_predictor_params(key, in_channels, hidden_channels, class_num,
                                num_layers, dtype=jnp.float32):
    """Deterministic init mirroring the PyTorch module's layer shapes.

    Weights stored as [F_in, F_out] (transposed vs. torch.nn.Linear).
    """
    dims = [in_channels] + [hidden_channels] * (num_layers - 1) + [class_num]
    params = []
    for i in range(num_layers):
        key, kw, kb = jax.random.split(key, 3)
        fin, fout = dims[i], dims[i + 1]
        bound = 1.0 / (fin ** 0.5)              # torch Linear default scale
        w = jax.random.uniform(kw, (fin, fout), dtype, -bound, bound)
        b = jax.random.uniform(kb, (fout,), dtype, -bound, bound)
        params.append((w, b))
    return params


def _reference_forward(x, params):
    B = x.shape[0]
    h = x.reshape(B, -1)
    hp = jax.lax.Precision.HIGHEST
    for (w, b) in params[:-1]:
        h = jnp.maximum(jnp.dot(h, w, precision=hp) + b, 0.0)
    w, b = params[-1]
    return jnp.dot(h, w, precision=hp) + b


if __name__ == "__main__":
    key = jax.random.PRNGKey(0)

    # Shapes consistent with the module: a [B, C, H, W] feature map that the
    # forward flattens; in_channels = C*H*W.
    B, C, H, W = 2, 4, 16, 16
    in_channels = C * H * W          # 1024
    hidden_channels = 32
    class_num = 10
    num_layers = 3

    k_x, k_p = jax.random.split(key)
    x = jax.random.normal(k_x, (B, C, H, W), jnp.float32)
    params = init_class_predictor_params(
        k_p, in_channels, hidden_channels, class_num, num_layers)

    fwd = jax.jit(class_predictor_forward)
    out = jax.block_until_ready(fwd(x, params))

    ref = _reference_forward(x, params)
    assert out.shape == (B, class_num), out.shape
    max_err = float(jnp.max(jnp.abs(out - ref)))
    assert jnp.allclose(out, ref, atol=1e-3, rtol=1e-3), f"mismatch: {max_err}"

    print("KERNEL_OK")
</pallas_src>

<mosaic_0001>
module attributes {stable_mosaic.version = 11 : i64} {
  func.func @_fused_mlp_kernel(%arg0: memref<8x1024xf32, #tpu.memory_space<vmem>>, %arg1: memref<1024x128xf32, #tpu.memory_space<vmem>>, %arg2: memref<1x128xf32, #tpu.memory_space<vmem>>, %arg3: memref<128x128xf32, #tpu.memory_space<vmem>>, %arg4: memref<1x128xf32, #tpu.memory_space<vmem>>, %arg5: memref<128x128xf32, #tpu.memory_space<vmem>>, %arg6: memref<1x128xf32, #tpu.memory_space<vmem>>, %arg7: memref<8x128xf32, #tpu.memory_space<vmem>>) attributes {dimension_semantics = [], scalar_prefetch = 0 : i64, scratch_operands = 0 : i64, tpu.core_type = #tpu.core_type<tc>} {
    %c0 = arith.constant 0 : index
    %c0_0 = arith.constant 0 : index
    %0 = vector.load %arg0[%c0, %c0_0] : memref<8x1024xf32, #tpu.memory_space<vmem>>, vector<8x1024xf32>
    %c0_1 = arith.constant 0 : index
    %c0_2 = arith.constant 0 : index
    %1 = vector.load %arg1[%c0_1, %c0_2] : memref<1024x128xf32, #tpu.memory_space<vmem>>, vector<1024x128xf32>
    %cst = arith.constant dense<0.000000e+00> : vector<8x128xf32>
    %2 = tpu.matmul %0, %1, %cst {dimension_numbers = #tpu.dot_dimension_numbers<[1], [0], [0], [1], [0, 0, 1, 1], [], []>} : vector<8x1024xf32>, vector<1024x128xf32>, vector<8x128xf32> -> vector<8x128xf32>
    %c0_3 = arith.constant 0 : index
    %c0_4 = arith.constant 0 : index
    %3 = vector.load %arg2[%c0_3, %c0_4] : memref<1x128xf32, #tpu.memory_space<vmem>>, vector<1x128xf32>
    %4 = vector.broadcast %3 : vector<1x128xf32> to vector<8x128xf32>
    %5 = arith.addf %2, %4 : vector<8x128xf32>
    %cst_5 = arith.constant 0.000000e+00 : f32
    %6 = vector.broadcast %cst_5 : f32 to vector<8x128xf32>
    %7 = arith.maximumf %5, %6 : vector<8x128xf32>
    %c0_6 = arith.constant 0 : index
    %c0_7 = arith.constant 0 : index
    %8 = vector.load %arg3[%c0_6, %c0_7] : memref<128x128xf32, #tpu.memory_space<vmem>>, vector<128x128xf32>
    %cst_8 = arith.constant dense<0.000000e+00> : vector<8x128xf32>
    %9 = tpu.matmul %7, %8, %cst_8 {dimension_numbers = #tpu.dot_dimension_numbers<[1], [0], [0], [1], [0, 0, 1, 1], [], []>} : vector<8x128xf32>, vector<128x128xf32>, vector<8x128xf32> -> vector<8x128xf32>
    %c0_9 = arith.constant 0 : index
    %c0_10 = arith.constant 0 : index
    %10 = vector.load %arg4[%c0_9, %c0_10] : memref<1x128xf32, #tpu.memory_space<vmem>>, vector<1x128xf32>
    %11 = vector.broadcast %10 : vector<1x128xf32> to vector<8x128xf32>
    %12 = arith.addf %9, %11 : vector<8x128xf32>
    %cst_11 = arith.constant 0.000000e+00 : f32
    %13 = vector.broadcast %cst_11 : f32 to vector<8x128xf32>
    %14 = arith.maximumf %12, %13 : vector<8x128xf32>
    %c0_12 = arith.constant 0 : index
    %c0_13 = arith.constant 0 : index
    %15 = vector.load %arg5[%c0_12, %c0_13] : memref<128x128xf32, #tpu.memory_space<vmem>>, vector<128x128xf32>
    %cst_14 = arith.constant dense<0.000000e+00> : vector<8x128xf32>
    %16 = tpu.matmul %14, %15, %cst_14 {dimension_numbers = #tpu.dot_dimension_numbers<[1], [0], [0], [1], [0, 0, 1, 1], [], []>} : vector<8x128xf32>, vector<128x128xf32>, vector<8x128xf32> -> vector<8x128xf32>
    %c0_15 = arith.constant 0 : index
    %c0_16 = arith.constant 0 : index
    %17 = vector.load %arg6[%c0_15, %c0_16] : memref<1x128xf32, #tpu.memory_space<vmem>>, vector<1x128xf32>
    %18 = vector.broadcast %17 : vector<1x128xf32> to vector<8x128xf32>
    %19 = arith.addf %16, %18 : vector<8x128xf32>
    %c0_17 = arith.constant 0 : index
    %c0_18 = arith.constant 0 : index
    %20 = vector.load %arg7[%c0_17, %c0_18] : memref<8x128xf32, #tpu.memory_space<vmem>>, vector<8x128xf32>
    tpu.vector_store %arg7[%c0_17, %c0_18], %19 {strides = array<i32>} : memref<8x128xf32, #tpu.memory_space<vmem>>, vector<8x128xf32>,
    return
  }
}

</mosaic_0001>

<llo_original>
// kernel: class_predictor_forward.1
$region0: #{class_predictor_forward.1}
  #allocation0 [shape = 'u32[]', space=smem, size = 0x4, offset = 0x4, fixed_abs, tag = 'smem constant byte address 0x4 - core index']
  #allocation1 [shape = 'u32[72,128]{1,0:T(1,128)}', space=vmem, size = 0x9000, scoped, tag = 'internal scratch']
  %s0 = inlined_call_operand.vmem [shape: f32[8,1024], index: 0, kind: input, shape index: {}]
  %s1 = inlined_call_operand.vmem [shape: f32[1024,128], index: 1, kind: input, shape index: {}]
  %s2 = inlined_call_operand.vmem [shape: f32[1,128], index: 2, kind: input, shape index: {}]
  %s3 = inlined_call_operand.vmem [shape: f32[128,128], index: 3, kind: input, shape index: {}]
  %s4 = inlined_call_operand.vmem [shape: f32[1,128], index: 4, kind: input, shape index: {}]
  %s5 = inlined_call_operand.vmem [shape: f32[128,128], index: 5, kind: input, shape index: {}]
  %s6 = inlined_call_operand.vmem [shape: f32[1,128], index: 6, kind: input, shape index: {}]
  %s7 = inlined_call_operand.vmem [shape: f32[8,128], index: 7, kind: output, shape index: {}]
  %s8 = sld [smem:[#allocation0]]
  $region38: #{class_predictor_forward.1} parent=0
    _
  %s10 = ssub.s32 1, %s8
  %s11 = scalar_select 0, %s10, %s8
  // Predicated region
  $region2: #{class_predictor_forward.1} parent=0 // pred_check
    _
  $region3: #{class_predictor_forward.1} parent=0 // pred_check_branch
    %13 = sbr.rel (0) target = $region5
  $region4: #{class_predictor_forward.1} parent=0 // pred_region
    _
  $region5: #{class_predictor_forward.1} parent=0 // pred_fallthru
    _
  // Predicated region
  $region6: #{class_predictor_forward.1} parent=0 // pred_check
    _
  $region7: #{class_predictor_forward.1} parent=0 // pred_check_branch
    %15 = sbr.rel (0) target = $region9
  $region8: #{class_predictor_forward.1} parent=0 // pred_region
    _
  $region9: #{class_predictor_forward.1} parent=0 // pred_fallthru
    _
  // Predicated region
  $region10: #{class_predictor_forward.1} parent=0 // pred_check
    _
  $region11: #{class_predictor_forward.1} parent=0 // pred_check_branch
    %17 = sbr.rel (0) target = $region13
  $region12: #{class_predictor_forward.1} parent=0 // pred_region
    _
  $region13: #{class_predictor_forward.1} parent=0 // pred_fallthru
    _
  // Predicated region
  $region14: #{class_predictor_forward.1} parent=0 // pred_check
    _
  $region15: #{class_predictor_forward.1} parent=0 // pred_check_branch
    %19 = sbr.rel (0) target = $region17
  $region16: #{class_predictor_forward.1} parent=0 // pred_region
    _
  $region17: #{class_predictor_forward.1} parent=0 // pred_fallthru
    _
  // Predicated region
  $region18: #{class_predictor_forward.1} parent=0 // pred_check
    _
  $region19: #{class_predictor_forward.1} parent=0 // pred_check_branch
    %21 = sbr.rel (0) target = $region21
  $region20: #{class_predictor_forward.1} parent=0 // pred_region
    _
  $region21: #{class_predictor_forward.1} parent=0 // pred_fallthru
    _
  // Predicated region
  $region22: #{class_predictor_forward.1} parent=0 // pred_check
    _
  $region23: #{class_predictor_forward.1} parent=0 // pred_check_branch
    %23 = sbr.rel (0) target = $region25
  $region24: #{class_predictor_forward.1} parent=0 // pred_region
    _
  $region25: #{class_predictor_forward.1} parent=0 // pred_fallthru
    _
  // Predicated region
  $region26: #{class_predictor_forward.1} parent=0 // pred_check
    _
  $region27: #{class_predictor_forward.1} parent=0 // pred_check_branch
    %25 = sbr.rel (0) target = $region29
  $region28: #{class_predictor_forward.1} parent=0 // pred_region
    _
  $region29: #{class_predictor_forward.1} parent=0 // pred_fallthru
    _
  %v26 = vld [vmem:[%s0] sm:$0xff]
  %v27 = vld [vmem:[%s0 + $0x8] sm:$0xff]
  %v28 = vld [vmem:[%s0 + $0x10] sm:$0xff]
  %v29 = vld [vmem:[%s0 + $0x18] sm:$0xff]
  %v30 = vld [vmem:[%s0 + $0x20] sm:$0xff]
  %v31 = vld [vmem:[%s0 + $0x28] sm:$0xff]
  %v32 = vld [vmem:[%s0 + $0x30] sm:$0xff]
  %v33 = vld [vmem:[%s0 + $0x38] sm:$0xff]
  %v34 = vld [vmem:[%s1] sm:$0xff]
  %v35 = vld [vmem:[%s1 + $0x8] sm:$0xff]
  %v36 = vld [vmem:[%s1 + $0x10] sm:$0xff]
  %v37 = vld [vmem:[%s1 + $0x18] sm:$0xff]
  %v38 = vld [vmem:[%s1 + $0x20] sm:$0xff]
  %v39 = vld [vmem:[%s1 + $0x28] sm:$0xff]
  %v40 = vld [vmem:[%s1 + $0x30] sm:$0xff]
  %v41 = vld [vmem:[%s1 + $0x38] sm:$0xff]
  %v42 = vld [vmem:[%s1 + $0x40] sm:$0xff]
  %v43 = vld [vmem:[%s1 + $0x48] sm:$0xff]
  %v44 = vld [vmem:[%s1 + $0x50] sm:$0xff]
  %v45 = vld [vmem:[%s1 + $0x58] sm:$0xff]
  %v46 = vld [vmem:[%s1 + $0x60] sm:$0xff]
  %v47 = vld [vmem:[%s1 + $0x68] sm:$0xff]
  %v48 = vld [vmem:[%s1 + $0x70] sm:$0xff]
  %v49 = vld [vmem:[%s1 + $0x78] sm:$0xff]
  %v50 = vld [vmem:[%s1 + $0x80] sm:$0xff]
  %v51 = vld [vmem:[%s1 + $0x88] sm:$0xff]
  %v52 = vld [vmem:[%s1 + $0x90] sm:$0xff]
  %v53 = vld [vmem:[%s1 + $0x98] sm:$0xff]
  %v54 = vld [vmem:[%s1 + $0xa0] sm:$0xff]
  %v55 = vld [vmem:[%s1 + $0xa8] sm:$0xff]
  %v56 = vld [vmem:[%s1 + $0xb0] sm:$0xff]
  %v57 = vld [vmem:[%s1 + $0xb8] sm:$0xff]
  %v58 = vld [vmem:[%s1 + $0xc0] sm:$0xff]
  %v59 = vld [vmem:[%s1 + $0xc8] sm:$0xff]
  %v60 = vld [vmem:[%s1 + $0xd0] sm:$0xff]
  %v61 = vld [vmem:[%s1 + $0xd8] sm:$0xff]
  %v62 = vld [vmem:[%s1 + $0xe0] sm:$0xff]
  %v63 = vld [vmem:[%s1 + $0xe8] sm:$0xff]
  %v64 = vld [vmem:[%s1 + $0xf0] sm:$0xff]
  %v65 = vld [vmem:[%s1 + $0xf8] sm:$0xff]
  %v66 = vld [vmem:[%s1 + $0x100] sm:$0xff]
  %v67 = vld [vmem:[%s1 + $0x108] sm:$0xff]
  %v68 = vld [vmem:[%s1 + $0x110] sm:$0xff]
  %v69 = vld [vmem:[%s1 + $0x118] sm:$0xff]
  %v70 = vld [vmem:[%s1 + $0x120] sm:$0xff]
  %v71 = vld [vmem:[%s1 + $0x128] sm:$0xff]
  %v72 = vld [vmem:[%s1 + $0x130] sm:$0xff]
  %v73 = vld [vmem:[%s1 + $0x138] sm:$0xff]
  %v74 = vld [vmem:[%s1 + $0x140] sm:$0xff]
  %v75 = vld [vmem:[%s1 + $0x148] sm:$0xff]
  %v76 = vld [vmem:[%s1 + $0x150] sm:$0xff]
  %v77 = vld [vmem:[%s1 + $0x158] sm:$0xff]
  %v78 = vld [vmem:[%s1 + $0x160] sm:$0xff]
  %v79 = vld [vmem:[%s1 + $0x168] sm:$0xff]
  %v80 = vld [vmem:[%s1 + $0x170] sm:$0xff]
  %v81 = vld [vmem:[%s1 + $0x178] sm:$0xff]
  %v82 = vld [vmem:[%s1 + $0x180] sm:$0xff]
  %v83 = vld [vmem:[%s1 + $0x188] sm:$0xff]
  %v84 = vld [vmem:[%s1 + $0x190] sm:$0xff]
  %v85 = vld [vmem:[%s1 + $0x198] sm:$0xff]
  %v86 = vld [vmem:[%s1 + $0x1a0] sm:$0xff]
  %v87 = vld [vmem:[%s1 + $0x1a8] sm:$0xff]
  %v88 = vld [vmem:[%s1 + $0x1b0] sm:$0xff]
  %v89 = vld [vmem:[%s1 + $0x1b8] sm:$0xff]
  %v90 = vld [vmem:[%s1 + $0x1c0] sm:$0xff]
  %v91 = vld [vmem:[%s1 + $0x1c8] sm:$0xff]
  %v92 = vld [vmem:[%s1 + $0x1d0] sm:$0xff]
  %v93 = vld [vmem:[%s1 + $0x1d8] sm:$0xff]
  %v94 = vld [vmem:[%s1 + $0x1e0] sm:$0xff]
  %v95 = vld [vmem:[%s1 + $0x1e8] sm:$0xff]
  %v96 = vld [vmem:[%s1 + $0x1f0] sm:$0xff]
  %v97 = vld [vmem:[%s1 + $0x1f8] sm:$0xff]
  %v98 = vld [vmem:[%s1 + $0x200] sm:$0xff]
  %v99 = vld [vmem:[%s1 + $0x208] sm:$0xff]
  %v100 = vld [vmem:[%s1 + $0x210] sm:$0xff]
  %v101 = vld [vmem:[%s1 + $0x218] sm:$0xff]
  %v102 = vld [vmem:[%s1 + $0x220] sm:$0xff]
  %v103 = vld [vmem:[%s1 + $0x228] sm:$0xff]
  %v104 = vld [vmem:[%s1 + $0x230] sm:$0xff]
  %v105 = vld [vmem:[%s1 + $0x238] sm:$0xff]
  %v106 = vld [vmem:[%s1 + $0x240] sm:$0xff]
  %v107 = vld [vmem:[%s1 + $0x248] sm:$0xff]
  %v108 = vld [vmem:[%s1 + $0x250] sm:$0xff]
  %v109 = vld [vmem:[%s1 + $0x258] sm:$0xff]
  %v110 = vld [vmem:[%s1 + $0x260] sm:$0xff]
  %v111 = vld [vmem:[%s1 + $0x268] sm:$0xff]
  %v112 = vld [vmem:[%s1 + $0x270] sm:$0xff]
  %v113 = vld [vmem:[%s1 + $0x278] sm:$0xff]
  %v114 = vld [vmem:[%s1 + $0x280] sm:$0xff]
  %v115 = vld [vmem:[%s1 + $0x288] sm:$0xff]
  %v116 = vld [vmem:[%s1 + $0x290] sm:$0xff]
  %v117 = vld [vmem:[%s1 + $0x298] sm:$0xff]
  %v118 = vld [vmem:[%s1 + $0x2a0] sm:$0xff]
  %v119 = vld [vmem:[%s1 + $0x2a8] sm:$0xff]
  %v120 = vld [vmem:[%s1 + $0x2b0] sm:$0xff]
  %v121 = vld [vmem:[%s1 + $0x2b8] sm:$0xff]
  %v122 = vld [vmem:[%s1 + $0x2c0] sm:$0xff]
  %v123 = vld [vmem:[%s1 + $0x2c8] sm:$0xff]
  %v124 = vld [vmem:[%s1 + $0x2d0] sm:$0xff]
  %v125 = vld [vmem:[%s1 + $0x2d8] sm:$0xff]
  %v126 = vld [vmem:[%s1 + $0x2e0] sm:$0xff]
  %v127 = vld [vmem:[%s1 + $0x2e8] sm:$0xff]
  %v128 = vld [vmem:[%s1 + $0x2f0] sm:$0xff]
  %v129 = vld [vmem:[%s1 + $0x2f8] sm:$0xff]
  %v130 = vld [vmem:[%s1 + $0x300] sm:$0xff]
  %v131 = vld [vmem:[%s1 + $0x308] sm:$0xff]
  %v132 = vld [vmem:[%s1 + $0x310] sm:$0xff]
  %v133 = vld [vmem:[%s1 + $0x318] sm:$0xff]
  %v134 = vld [vmem:[%s1 + $0x320] sm:$0xff]
  %v135 = vld [vmem:[%s1 + $0x328] sm:$0xff]
  %v136 = vld [vmem:[%s1 + $0x330] sm:$0xff]
  %v137 = vld [vmem:[%s1 + $0x338] sm:$0xff]
  %v138 = vld [vmem:[%s1 + $0x340] sm:$0xff]
  %v139 = vld [vmem:[%s1 + $0x348] sm:$0xff]
  %v140 = vld [vmem:[%s1 + $0x350] sm:$0xff]
  %v141 = vld [vmem:[%s1 + $0x358] sm:$0xff]
  %v142 = vld [vmem:[%s1 + $0x360] sm:$0xff]
  %v143 = vld [vmem:[%s1 + $0x368] sm:$0xff]
  %v144 = vld [vmem:[%s1 + $0x370] sm:$0xff]
  %v145 = vld [vmem:[%s1 + $0x378] sm:$0xff]
  %v146 = vld [vmem:[%s1 + $0x380] sm:$0xff]
  %v147 = vld [vmem:[%s1 + $0x388] sm:$0xff]
  %v148 = vld [vmem:[%s1 + $0x390] sm:$0xff]
  %v149 = vld [vmem:[%s1 + $0x398] sm:$0xff]
  %v150 = vld [vmem:[%s1 + $0x3a0] sm:$0xff]
  %v151 = vld [vmem:[%s1 + $0x3a8] sm:$0xff]
  %v152 = vld [vmem:[%s1 + $0x3b0] sm:$0xff]
  %v153 = vld [vmem:[%s1 + $0x3b8] sm:$0xff]
  %v154 = vld [vmem:[%s1 + $0x3c0] sm:$0xff]
  %v155 = vld [vmem:[%s1 + $0x3c8] sm:$0xff]
  %v156 = vld [vmem:[%s1 + $0x3d0] sm:$0xff]
  %v157 = vld [vmem:[%s1 + $0x3d8] sm:$0xff]
  %v158 = vld [vmem:[%s1 + $0x3e0] sm:$0xff]
  %v159 = vld [vmem:[%s1 + $0x3e8] sm:$0xff]
  %v160 = vld [vmem:[%s1 + $0x3f0] sm:$0xff]
  %v161 = vld [vmem:[%s1 + $0x3f8] sm:$0xff]
  %v162 = vld [vmem:[%s2] sm:$0x1]
  %v164 = vperm.slane %v162, 0
  %166 = vmatpush.msra.mxu0 %v49
  %167 = vmatpush.msra.mxu0 %v48
  %168 = vmatpush.msra.mxu0 %v47
  %169 = vmatpush.msra.mxu0 %v46
  %170 = vmatpush.msra.mxu0 %v45
  %171 = vmatpush.msra.mxu0 %v44
  %172 = vmatpush.msra.mxu0 %v43
  %173 = vmatpush.msra.mxu0 %v42
  %174 = vmatpush.msra.mxu0 %v41
  %175 = vmatpush.msra.mxu0 %v40
  %176 = vmatpush.msra.mxu0 %v39
  %177 = vmatpush.msra.mxu0 %v38
  %178 = vmatpush.msra.mxu0 %v37
  %179 = vmatpush.msra.mxu0 %v36
  %180 = vmatpush.msra.mxu0 %v35
  %181 = vmatpush.msra.mxu0 %v34
  %182 = vmatmul.f32.gmra.mxu0 %v26
  %v183 = vpop.f32.mrf.mxu0
  %v184 = vadd.f32 %v164, %v183
  %185 = vdwg.mxu0
  %186 = vmatpush.msra.mxu0 %v65
  %187 = vmatpush.msra.mxu0 %v64
  %188 = vmatpush.msra.mxu0 %v63
  %189 = vmatpush.msra.mxu0 %v62
  %190 = vmatpush.msra.mxu0 %v61
  %191 = vmatpush.msra.mxu0 %v60
  %192 = vmatpush.msra.mxu0 %v59
  %193 = vmatpush.msra.mxu0 %v58
  %194 = vmatpush.msra.mxu0 %v57
  %195 = vmatpush.msra.mxu0 %v56
  %196 = vmatpush.msra.mxu0 %v55
  %197 = vmatpush.msra.mxu0 %v54
  %198 = vmatpush.msra.mxu0 %v53
  %199 = vmatpush.msra.mxu0 %v52
  %200 = vmatpush.msra.mxu0 %v51
  %201 = vmatpush.msra.mxu0 %v50
  %202 = vmatmul.f32.gmra.mxu0 %v27
  %v203 = vpop.f32.mrf.mxu0
  %v204 = vadd.f32 %v184, %v203
  %205 = vdwg.mxu0
  %206 = vmatpush.msra.mxu0 %v81
  %207 = vmatpush.msra.mxu0 %v80
  %208 = vmatpush.msra.mxu0 %v79
  %209 = vmatpush.msra.mxu0 %v78
  %210 = vmatpush.msra.mxu0 %v77
  %211 = vmatpush.msra.mxu0 %v76
  %212 = vmatpush.msra.mxu0 %v75
  %213 = vmatpush.msra.mxu0 %v74
  %214 = vmatpush.msra.mxu0 %v73
  %215 = vmatpush.msra.mxu0 %v72
  %216 = vmatpush.msra.mxu0 %v71
  %217 = vmatpush.msra.mxu0 %v70
  %218 = vmatpush.msra.mxu0 %v69
  %219 = vmatpush.msra.mxu0 %v68
  %220 = vmatpush.msra.mxu0 %v67
  %221 = vmatpush.msra.mxu0 %v66
  %222 = vmatmul.f32.gmra.mxu0 %v28
  %v223 = vpop.f32.mrf.mxu0
  %v224 = vadd.f32 %v204, %v223
  %225 = vdwg.mxu0
  %226 = vmatpush.msra.mxu0 %v97
  %227 = vmatpush.msra.mxu0 %v96
  %228 = vmatpush.msra.mxu0 %v95
  %229 = vmatpush.msra.mxu0 %v94
  %230 = vmatpush.msra.mxu0 %v93
  %231 = vmatpush.msra.mxu0 %v92
  %232 = vmatpush.msra.mxu0 %v91
  %233 = vmatpush.msra.mxu0 %v90
  %234 = vmatpush.msra.mxu0 %v89
  %235 = vmatpush.msra.mxu0 %v88
  %236 = vmatpush.msra.mxu0 %v87
  %237 = vmatpush.msra.mxu0 %v86
  %238 = vmatpush.msra.mxu0 %v85
  %239 = vmatpush.msra.mxu0 %v84
  %240 = vmatpush.msra.mxu0 %v83
  %241 = vmatpush.msra.mxu0 %v82
  %242 = vmatmul.f32.gmra.mxu0 %v29
  %v243 = vpop.f32.mrf.mxu0
  %v244 = vadd.f32 %v224, %v243
  %245 = vdwg.mxu0
  %246 = vmatpush.msra.mxu0 %v113
  %247 = vmatpush.msra.mxu0 %v112
  %248 = vmatpush.msra.mxu0 %v111
  %249 = vmatpush.msra.mxu0 %v110
  %250 = vmatpush.msra.mxu0 %v109
  %251 = vmatpush.msra.mxu0 %v108
  %252 = vmatpush.msra.mxu0 %v107
  %253 = vmatpush.msra.mxu0 %v106
  %254 = vmatpush.msra.mxu0 %v105
  %255 = vmatpush.msra.mxu0 %v104
  %256 = vmatpush.msra.mxu0 %v103
  %257 = vmatpush.msra.mxu0 %v102
  %258 = vmatpush.msra.mxu0 %v101
  %259 = vmatpush.msra.mxu0 %v100
  %260 = vmatpush.msra.mxu0 %v99
  %261 = vmatpush.msra.mxu0 %v98
  %262 = vmatmul.f32.gmra.mxu0 %v30
  %v263 = vpop.f32.mrf.mxu0
  %v264 = vadd.f32 %v244, %v263
  %265 = vdwg.mxu0
  %266 = vmatpush.msra.mxu0 %v129
  %267 = vmatpush.msra.mxu0 %v128
  %268 = vmatpush.msra.mxu0 %v127
  %269 = vmatpush.msra.mxu0 %v126
  %270 = vmatpush.msra.mxu0 %v125
  %271 = vmatpush.msra.mxu0 %v124
  %272 = vmatpush.msra.mxu0 %v123
  %273 = vmatpush.msra.mxu0 %v122
  %274 = vmatpush.msra.mxu0 %v121
  %275 = vmatpush.msra.mxu0 %v120
  %276 = vmatpush.msra.mxu0 %v119
  %277 = vmatpush.msra.mxu0 %v118
  %278 = vmatpush.msra.mxu0 %v117
  %279 = vmatpush.msra.mxu0 %v116
  %280 = vmatpush.msra.mxu0 %v115
  %281 = vmatpush.msra.mxu0 %v114
  %282 = vmatmul.f32.gmra.mxu0 %v31
  %v283 = vpop.f32.mrf.mxu0
  %v284 = vadd.f32 %v264, %v283
  %285 = vdwg.mxu0
  %286 = vmatpush.msra.mxu0 %v145
  %287 = vmatpush.msra.mxu0 %v144
  %288 = vmatpush.msra.mxu0 %v143
  %289 = vmatpush.msra.mxu0 %v142
  %290 = vmatpush.msra.mxu0 %v141
  %291 = vmatpush.msra.mxu0 %v140
  %292 = vmatpush.msra.mxu0 %v139
  %293 = vmatpush.msra.mxu0 %v138
  %294 = vmatpush.msra.mxu0 %v137
  %295 = vmatpush.msra.mxu0 %v136
  %296 = vmatpush.msra.mxu0 %v135
  %297 = vmatpush.msra.mxu0 %v134
  %298 = vmatpush.msra.mxu0 %v133
  %299 = vmatpush.msra.mxu0 %v132
  %300 = vmatpush.msra.mxu0 %v131
  %301 = vmatpush.msra.mxu0 %v130
  %302 = vmatmul.f32.gmra.mxu0 %v32
  %v303 = vpop.f32.mrf.mxu0
  %v304 = vadd.f32 %v284, %v303
  %305 = vdwg.mxu0
  %306 = vmatpush.msra.mxu0 %v161
  %307 = vmatpush.msra.mxu0 %v160
  %308 = vmatpush.msra.mxu0 %v159
  %309 = vmatpush.msra.mxu0 %v158
  %310 = vmatpush.msra.mxu0 %v157
  %311 = vmatpush.msra.mxu0 %v156
  %312 = vmatpush.msra.mxu0 %v155
  %313 = vmatpush.msra.mxu0 %v154
  %314 = vmatpush.msra.mxu0 %v153
  %315 = vmatpush.msra.mxu0 %v152
  %316 = vmatpush.msra.mxu0 %v151
  %317 = vmatpush.msra.mxu0 %v150
  %318 = vmatpush.msra.mxu0 %v149
  %319 = vmatpush.msra.mxu0 %v148
  %320 = vmatpush.msra.mxu0 %v147
  %321 = vmatpush.msra.mxu0 %v146
  %322 = vmatmul.f32.gmra.mxu0 %v33
  %v323 = vpop.f32.mrf.mxu0
  %v324 = vadd.f32 %v304, %v323
  %325 = vdwg.mxu0
  %v326 = vmax.f32 %v324, 0.0
  %v327 = vld [vmem:[%s3] sm:$0xff]
  %v328 = vld [vmem:[%s3 + $0x8] sm:$0xff]
  %v329 = vld [vmem:[%s3 + $0x10] sm:$0xff]
  %v330 = vld [vmem:[%s3 + $0x18] sm:$0xff]
  %v331 = vld [vmem:[%s3 + $0x20] sm:$0xff]
  %v332 = vld [vmem:[%s3 + $0x28] sm:$0xff]
  %v333 = vld [vmem:[%s3 + $0x30] sm:$0xff]
  %v334 = vld [vmem:[%s3 + $0x38] sm:$0xff]
  %v335 = vld [vmem:[%s3 + $0x40] sm:$0xff]
  %v336 = vld [vmem:[%s3 + $0x48] sm:$0xff]
  %v337 = vld [vmem:[%s3 + $0x50] sm:$0xff]
  %v338 = vld [vmem:[%s3 + $0x58] sm:$0xff]
  %v339 = vld [vmem:[%s3 + $0x60] sm:$0xff]
  %v340 = vld [vmem:[%s3 + $0x68] sm:$0xff]
  %v341 = vld [vmem:[%s3 + $0x70] sm:$0xff]
  %v342 = vld [vmem:[%s3 + $0x78] sm:$0xff]
  %v343 = vld [vmem:[%s4] sm:$0x1]
  %v345 = vperm.slane %v343, 0
  %347 = vmatpush.msra.mxu0 %v342
  %348 = vmatpush.msra.mxu0 %v341
  %349 = vmatpush.msra.mxu0 %v340
  %350 = vmatpush.msra.mxu0 %v339
  %351 = vmatpush.msra.mxu0 %v338
  %352 = vmatpush.msra.mxu0 %v337
  %353 = vmatpush.msra.mxu0 %v336
  %354 = vmatpush.msra.mxu0 %v335
  %355 = vmatpush.msra.mxu0 %v334
  %356 = vmatpush.msra.mxu0 %v333
  %357 = vmatpush.msra.mxu0 %v332
  %358 = vmatpush.msra.mxu0 %v331
  %359 = vmatpush.msra.mxu0 %v330
  %360 = vmatpush.msra.mxu0 %v329
  %361 = vmatpush.msra.mxu0 %v328
  %362 = vmatpush.msra.mxu0 %v327
  %363 = vmatmul.f32.gmra.mxu0 %v326
  %v364 = vpop.f32.mrf.mxu0
  %v365 = vadd.f32 %v345, %v364
  %366 = vdwg.mxu0
  %v367 = vmax.f32 %v365, 0.0
  %v368 = vld [vmem:[%s5] sm:$0xff]
  %v369 = vld [vmem:[%s5 + $0x8] sm:$0xff]
  %v370 = vld [vmem:[%s5 + $0x10] sm:$0xff]
  %v371 = vld [vmem:[%s5 + $0x18] sm:$0xff]
  %v372 = vld [vmem:[%s5 + $0x20] sm:$0xff]
  %v373 = vld [vmem:[%s5 + $0x28] sm:$0xff]
  %v374 = vld [vmem:[%s5 + $0x30] sm:$0xff]
  %v375 = vld [vmem:[%s5 + $0x38] sm:$0xff]
  %v376 = vld [vmem:[%s5 + $0x40] sm:$0xff]
  %v377 = vld [vmem:[%s5 + $0x48] sm:$0xff]
  %v378 = vld [vmem:[%s5 + $0x50] sm:$0xff]
  %v379 = vld [vmem:[%s5 + $0x58] sm:$0xff]
  %v380 = vld [vmem:[%s5 + $0x60] sm:$0xff]
  %v381 = vld [vmem:[%s5 + $0x68] sm:$0xff]
  %v382 = vld [vmem:[%s5 + $0x70] sm:$0xff]
  %v383 = vld [vmem:[%s5 + $0x78] sm:$0xff]
  %v384 = vld [vmem:[%s6] sm:$0x1]
  %v386 = vperm.slane %v384, 0
  %388 = vmatpush.msra.mxu0 %v383
  %389 = vmatpush.msra.mxu0 %v382
  %390 = vmatpush.msra.mxu0 %v381
  %391 = vmatpush.msra.mxu0 %v380
  %392 = vmatpush.msra.mxu0 %v379
  %393 = vmatpush.msra.mxu0 %v378
  %394 = vmatpush.msra.mxu0 %v377
  %395 = vmatpush.msra.mxu0 %v376
  %396 = vmatpush.msra.mxu0 %v375
  %397 = vmatpush.msra.mxu0 %v374
  %398 = vmatpush.msra.mxu0 %v373
  %399 = vmatpush.msra.mxu0 %v372
  %400 = vmatpush.msra.mxu0 %v371
  %401 = vmatpush.msra.mxu0 %v370
  %402 = vmatpush.msra.mxu0 %v369
  %403 = vmatpush.msra.mxu0 %v368
  %404 = vmatmul.f32.gmra.mxu0 %v367
  %v405 = vpop.f32.mrf.mxu0
  %v406 = vadd.f32 %v386, %v405
  %407 = vdwg.mxu0
  %408 = vst [vmem:[%s7] sm:$0xff] %v406
  // Predicated region
  $region30: #{class_predictor_forward.1} parent=0 // pred_check
    _
  $region31: #{class_predictor_forward.1} parent=0 // pred_check_branch
    %410 = sbr.rel (0) target = $region33
  $region32: #{class_predictor_forward.1} parent=0 // pred_region
    _
  $region33: #{class_predictor_forward.1} parent=0 // pred_fallthru
    _
  // Predicated region
  $region34: #{class_predictor_forward.1} parent=0 // pred_check
    _
  $region35: #{class_predictor_forward.1} parent=0 // pred_check_branch
    %412 = sbr.rel (0) target = $region37
  $region36: #{class_predictor_forward.1} parent=0 // pred_region
    _
  $region37: #{class_predictor_forward.1} parent=0 // pred_fallthru
    _

</llo_original>
